<compile_context>
chip_gen: v5e
topology: v5e:2x2
jax: 0.10.0
libtpu: 0.0.40
codegen_flags: <defaults>
</compile_context>

<pallas_src>
import functools

import jax
import jax.numpy as jnp
from jax.experimental import pallas as pl
from jax.experimental.pallas import tpu as pltpu


@functools.lru_cache(maxsize=None)
def _build_directnet_call(nin: int, nout: int, nhidden: int, dtype_name: str):
    """Build (once per shape/dtype) the pallas_call implementing the forward."""
    dtype = jnp.dtype(dtype_name)
    m = nin * nout
    inv_nhidden = 1.0 / float(nhidden)

    def kernel(l1_ref, l2_ref, out_ref):
        # l1_ref: (nin, H), l2_ref: (nin*nout, H), out_ref: (1, nin*nout)
        prods = []
        for i in range(nin):  # tiny static loop, unrolled at trace time
            l1_row = l1_ref[i:i + 1, :]                   # (1, H)
            l2_blk = l2_ref[i * nout:(i + 1) * nout, :]   # (nout, H)
            prods.append(l1_row * l2_blk)                 # sublane broadcast (VPU)
        prod = jnp.concatenate(prods, axis=0)             # (nin*nout, H), sublane concat
        red = jnp.sum(prod, axis=1) * inv_nhidden         # lane reduce (XLU) -> (nin*nout,)
        out_ref[0, :] = red.astype(out_ref.dtype)         # single lane-aligned row store

    return pl.pallas_call(
        kernel,
        out_shape=jax.ShapeDtypeStruct((1, m), dtype),
        in_specs=[
            pl.BlockSpec(memory_space=pltpu.MemorySpace.VMEM),
            pl.BlockSpec(memory_space=pltpu.MemorySpace.VMEM),
        ],
        out_specs=pl.BlockSpec(memory_space=pltpu.MemorySpace.VMEM),
    )


@jax.jit
def directnet_forward(layer1: jax.Array, layer2: jax.Array) -> jax.Array:
    """Pallas implementation of DirectNet.forward().

    layer1: (nin, 1, nhidden) float32
    layer2: (nin, nout, nhidden) float32
    returns (nin, nout) float32
    """
    nin, one, nhidden = layer1.shape
    assert one == 1
    nin2, nout, nhidden2 = layer2.shape
    assert nin2 == nin and nhidden2 == nhidden

    call = _build_directnet_call(nin, nout, nhidden, str(layer2.dtype))

    l1_2d = layer1.reshape(nin, nhidden)            # free metadata reshape
    l2_2d = layer2.reshape(nin * nout, nhidden)     # free (contiguous) reshape
    out_flat = call(l1_2d, l2_2d)                   # (1, nin*nout)
    return out_flat.reshape(nin, nout)              # free


if __name__ == "__main__":
    # Module hyperparameters (small, consistent with DirectNet.__init__)
    nin, nhidden, nout = 4, 32, 8
    ini_std = 0.5
    dtype = jnp.float32

    key = jax.random.PRNGKey(0)

    # Deterministic parameter init mirroring the torch init:
    #   layer1 <- ones_(...)        shape (nin, 1, nhidden)
    #   layer2 <- normal_(0, 0.5)   shape (nin, nout, nhidden)
    layer1 = jnp.ones((nin, 1, nhidden), dtype=dtype)
    layer2 = ini_std * jax.random.normal(key, (nin, nout, nhidden), dtype=dtype)

    out = directnet_forward(layer1, layer2)
    out = jax.block_until_ready(out)

    # Reference check (plain JAX) -- same semantics as the torch forward.
    ref = jnp.sum(layer1 * layer2, axis=2) / nhidden
    assert out.shape == (nin, nout)
    assert jnp.allclose(out, ref, rtol=1e-6, atol=1e-6)

    print("KERNEL_OK")
</pallas_src>

<mosaic_0001>
module attributes {stable_mosaic.version = 11 : i64} {
  func.func @kernel(%arg0: memref<4x32xf32, #tpu.memory_space<vmem>>, %arg1: memref<32x32xf32, #tpu.memory_space<vmem>>, %arg2: memref<1x32xf32, #tpu.memory_space<vmem>>) attributes {dimension_semantics = [], scalar_prefetch = 0 : i64, scratch_operands = 0 : i64, tpu.core_type = #tpu.core_type<tc>} {
    %c0 = arith.constant 0 : index
    %c0_0 = arith.constant 0 : index
    %0 = vector.load %arg0[%c0, %c0_0] : memref<4x32xf32, #tpu.memory_space<vmem>>, vector<1x32xf32>
    %c0_1 = arith.constant 0 : index
    %c0_2 = arith.constant 0 : index
    %1 = vector.load %arg1[%c0_1, %c0_2] : memref<32x32xf32, #tpu.memory_space<vmem>>, vector<8x32xf32>
    %2 = vector.broadcast %0 : vector<1x32xf32> to vector<8x32xf32>
    %3 = arith.mulf %2, %1 : vector<8x32xf32>
    %c1 = arith.constant 1 : index
    %c0_3 = arith.constant 0 : index
    %4 = vector.load %arg0[%c1, %c0_3] : memref<4x32xf32, #tpu.memory_space<vmem>>, vector<1x32xf32>
    %c8 = arith.constant 8 : index
    %c0_4 = arith.constant 0 : index
    %5 = vector.load %arg1[%c8, %c0_4] : memref<32x32xf32, #tpu.memory_space<vmem>>, vector<8x32xf32>
    %6 = vector.broadcast %4 : vector<1x32xf32> to vector<8x32xf32>
    %7 = arith.mulf %6, %5 : vector<8x32xf32>
    %c2 = arith.constant 2 : index
    %c0_5 = arith.constant 0 : index
    %8 = vector.load %arg0[%c2, %c0_5] : memref<4x32xf32, #tpu.memory_space<vmem>>, vector<1x32xf32>
    %c16 = arith.constant 16 : index
    %c0_6 = arith.constant 0 : index
    %9 = vector.load %arg1[%c16, %c0_6] : memref<32x32xf32, #tpu.memory_space<vmem>>, vector<8x32xf32>
    %10 = vector.broadcast %8 : vector<1x32xf32> to vector<8x32xf32>
    %11 = arith.mulf %10, %9 : vector<8x32xf32>
    %c3 = arith.constant 3 : index
    %c0_7 = arith.constant 0 : index
    %12 = vector.load %arg0[%c3, %c0_7] : memref<4x32xf32, #tpu.memory_space<vmem>>, vector<1x32xf32>
    %c24 = arith.constant 24 : index
    %c0_8 = arith.constant 0 : index
    %13 = vector.load %arg1[%c24, %c0_8] : memref<32x32xf32, #tpu.memory_space<vmem>>, vector<8x32xf32>
    %14 = vector.broadcast %12 : vector<1x32xf32> to vector<8x32xf32>
    %15 = arith.mulf %14, %13 : vector<8x32xf32>
    %16 = tpu.concatenate %3, %7, %11, %15 in 0 : vector<8x32xf32>, vector<8x32xf32>, vector<8x32xf32>, vector<8x32xf32> -> vector<32x32xf32>
    %cst = arith.constant dense<0.000000e+00> : vector<32xf32>
    %17 = vector.multi_reduction <add>, %16, %cst [1] : vector<32x32xf32> to vector<32xf32>
    %cst_9 = arith.constant 3.125000e-02 : f32
    %18 = vector.broadcast %cst_9 : f32 to vector<32xf32>
    %19 = arith.mulf %17, %18 : vector<32xf32>
    %c0_10 = arith.constant 0 : index
    %c0_11 = arith.constant 0 : index
    %20 = vector.load %arg2[%c0_10, %c0_11] : memref<1x32xf32, #tpu.memory_space<vmem>>, vector<1x32xf32>
    %21 = vector.shape_cast %20 : vector<1x32xf32> to vector<32xf32>
    %22 = vector.shape_cast %19 : vector<32xf32> to vector<1x32xf32>
    tpu.vector_store %arg2[%c0_10, %c0_11], %22 {strides = array<i32>} : memref<1x32xf32, #tpu.memory_space<vmem>>, vector<1x32xf32>,
    return
  }
}

</mosaic_0001>

<llo_original>
// kernel: directnet_forward.1
$region0: #{directnet_forward.1}
  #allocation0 [shape = 'u32[]', space=smem, size = 0x4, offset = 0x4, fixed_abs, tag = 'smem constant byte address 0x4 - core index']
  #allocation1 [shape = 'u32[72,128]{1,0:T(1,128)}', space=vmem, size = 0x9000, scoped, tag = 'internal scratch']
  %s0 = inlined_call_operand.hbm [shape: f32[4,32], index: 0, kind: input, shape index: {}]
  %s1 = inlined_call_operand.hbm [shape: f32[32,32], index: 1, kind: input, shape index: {}]
  %s2 = inlined_call_operand.vmem [shape: f32[1,32], index: 2, kind: output, shape index: {}]
  %s3 = sld [smem:[#allocation0]]
  $region26: #{directnet_forward.1} parent=0
    _
  %s5 = ssub.s32 1, %s3
  %s6 = scalar_select 0, %s5, %s3
  $region1: #{directnet_forward.1} parent=0
    #allocation2 [shape = 'u8[2048]{0}', space=vmem, size = 0x800, scoped, tag = 'input window, operand 0, single buffered']
    #allocation3 [shape = 's32[1]{0}', space=sflag, size = 0x4, scoped, tag = 'scoped memory for directnet_forward.1']
    #allocation4 [shape = 'u8[16384]{0}', space=vmem, size = 0x4000, scoped, tag = 'input window, operand 1, single buffered']
    #allocation5 [shape = 's32[1]{0}', space=sflag, size = 0x4, scoped, tag = 'scoped memory for directnet_forward.1']
    %7 = vsyncpa [#allocation3], 0
    %8 = vsyncpa [#allocation5], 0
    // Predicated region
    $region2: #{directnet_forward.1} parent=1 // pred_check
      _
    $region3: #{directnet_forward.1} parent=1 // pred_check_branch
      %10 = sbr.rel (0) target = $region5
    $region4: #{directnet_forward.1} parent=1 // pred_region
      %12 = vsyncadd [#allocation3], 0
      %s14 = sshll.u32 %s0, 4
      %s15 = int_to_ptr.hbm [resolvable:$true] %s14
      %s16 = sshll.u32 [#allocation2], 4
      %s17 = int_to_ptr.vmem [resolvable:$true] %s16
      %19 = dma.hbm_to_vmem [thread:$0]  %s15, 64, %s17, [#allocation3]
    $region5: #{directnet_forward.1} parent=1 // pred_fallthru
      _
    // Predicated region
    $region6: #{directnet_forward.1} parent=1 // pred_check
      _
    $region7: #{directnet_forward.1} parent=1 // pred_check_branch
      %21 = sbr.rel (0) target = $region9
    $region8: #{directnet_forward.1} parent=1 // pred_region
      %23 = vsyncadd [#allocation5], 0
      %s24 = sshll.u32 %s1, 4
      %s25 = int_to_ptr.hbm [resolvable:$true] %s24
      %s26 = sshll.u32 [#allocation4], 4
      %s27 = int_to_ptr.vmem [resolvable:$true] %s26
      %32 = dma.hbm_to_vmem [thread:$0]  %s25, 512, %s27, [#allocation5], 128, 128, 8
    $region9: #{directnet_forward.1} parent=1 // pred_fallthru
      _
    // Predicated region
    $region10: #{directnet_forward.1} parent=1 // pred_check
      _
    $region11: #{directnet_forward.1} parent=1 // pred_check_branch
      %34 = sbr.rel (0) target = $region13
    $region12: #{directnet_forward.1} parent=1 // pred_region
      %36 = dma.done [#allocation3], 64
    $region13: #{directnet_forward.1} parent=1 // pred_fallthru
      _
    // Predicated region
    $region14: #{directnet_forward.1} parent=1 // pred_check
      _
    $region15: #{directnet_forward.1} parent=1 // pred_check_branch
      %38 = sbr.rel (0) target = $region17
    $region16: #{directnet_forward.1} parent=1 // pred_region
      %40 = dma.done [#allocation5], 512
    $region17: #{directnet_forward.1} parent=1 // pred_fallthru
      _
    %v41 = vld [vmem:[#allocation2] sm:$0x1]
    %v42 = vld [vmem:[#allocation4] sm:$0xff]
    %v43 = vperm.slane %v41, 0
    %v44 = vmul.f32 %v43, %v42
    %v45 = vld [vmem:[#allocation2 + $0x1] sm:$0x1]
    %v46 = vld [vmem:[#allocation4 + $0x8] sm:$0xff]
    %v47 = vperm.slane %v45, 0
    %v48 = vmul.f32 %v47, %v46
    %v49 = vld [vmem:[#allocation2 + $0x2] sm:$0x1]
    %v50 = vld [vmem:[#allocation4 + $0x10] sm:$0xff]
    %v51 = vperm.slane %v49, 0
    %v52 = vmul.f32 %v51, %v50
    %v53 = vld [vmem:[#allocation2 + $0x3] sm:$0x1]
    %v54 = vld [vmem:[#allocation4 + $0x18] sm:$0xff]
    %v55 = vperm.slane %v53, 0
    %v56 = vmul.f32 %v55, %v54
    %vm57 = vcmask 261120
    %v58 = vsel %vm57, %v44, 0.0
    %59 = vadd.xlane.f32.xlu0 %v58
    %v60 = vpop.xlane.xlu0 %59
    %v61 = vsel %vm57, %v48, 0.0
    %62 = vadd.xlane.f32.xlu0 %v61
    %v63 = vpop.xlane.xlu0 %62
    %v64 = vsel %vm57, %v52, 0.0
    %65 = vadd.xlane.f32.xlu0 %v64
    %v66 = vpop.xlane.xlu0 %65
    %v67 = vsel %vm57, %v56, 0.0
    %68 = vadd.xlane.f32.xlu0 %v67
    %v69 = vpop.xlane.xlu0 %68
    %v70 = vmul.f32 %v60, 0.03125
    %v71 = vmul.f32 %v63, 0.03125
    %v72 = vmul.f32 %v66, 0.03125
    %v73 = vmul.f32 %v69, 0.03125
    %v78 = vlaneseq
    %v79 = vand.u32 %v78, 127
    %v80 = vperm.slane %v70, %v79
    %v81 = vadd.s32 %v79, 4294967288
    %v82 = vperm.slane %v71, %v81
    %vm83 = vcmask 130112
    %v84 = vsel %vm83, %v82, %v80
    %v85 = vadd.s32 %v79, 4294967280
    %v86 = vperm.slane %v72, %v85
    %vm87 = vcmask 195712
    %v88 = vsel %vm87, %v86, %v84
    %v89 = vadd.s32 %v79, 4294967272
    %v90 = vperm.slane %v73, %v89
    %vm91 = vcmask 261312
    %v92 = vsel %vm91, %v90, %v88
    %vm94 = vcmask 253952
    %95 = vst.msk [vmem:[%s2] sm:$0x1] %vm94, %v92
    // Predicated region
    $region18: #{directnet_forward.1} parent=1 // pred_check
      _
    $region19: #{directnet_forward.1} parent=1 // pred_check_branch
      %97 = sbr.rel (0) target = $region21
    $region20: #{directnet_forward.1} parent=1 // pred_region
      _
    $region21: #{directnet_forward.1} parent=1 // pred_fallthru
      _
    // Predicated region
    $region22: #{directnet_forward.1} parent=1 // pred_check
      _
    $region23: #{directnet_forward.1} parent=1 // pred_check_branch
      %99 = sbr.rel (0) target = $region25
    $region24: #{directnet_forward.1} parent=1 // pred_region
      _
    $region25: #{directnet_forward.1} parent=1 // pred_fallthru
      _
    %100 = vsyncpa [#allocation3], 1
    %101 = vsyncpa [#allocation5], 1

</llo_original>
